<compile_context>
chip_gen: v5e
topology: v5e:2x2
jax: 0.10.0
libtpu: 0.0.40
codegen_flags: <defaults>
</compile_context>

<pallas_src>
import functools

import jax
import jax.numpy as jnp
from jax.experimental import pallas as pl
from jax.experimental.pallas import tpu as pltpu

EPS = 1e-5
LANE = 128


def _cdiv(a, b):
    return -(-a // b)


def _round_up(n, m):
    return ((n + m - 1) // m) * m


def _pad2(a, rows, cols):
    return jnp.pad(a, ((0, rows - a.shape[0]), (0, cols - a.shape[1])))


_VMEM_CAP_CACHE = None


def _vmem_cap_bytes():
    """Per-generation scoped-VMEM cap with headroom under the physical size."""
    global _VMEM_CAP_CACHE
    if _VMEM_CAP_CACHE is None:
        try:
            phys = int(pltpu.get_tpu_info().vmem_capacity_bytes)
        except Exception:
            phys = 64 * 2**20  # conservative fallback (v7x physical VMEM)
        _VMEM_CAP_CACHE = min(int(0.75 * phys), 100 * 2**20)
    return _VMEM_CAP_CACHE


def _fused_vmem_need(tb, d_in_p, h_p, out_p, b_pad):
    weights = 2 * (d_in_p * h_p + h_p * out_p) * 2      # double-buffered bf16 weights
    vectors = 2 * (h_p + 3 * out_p) * 4                 # biases / gamma / beta (f32)
    x_tiles = 2 * tb * d_in_p * 2                       # double-buffered bf16 x tiles
    inter = tb * (h_p + out_p) * 4                      # in-flight h, z
    out_resident = b_pad * out_p * 4                    # resident pre-BN z / output
    stats_tmp = 3 * b_pad * out_p * 4                   # last-step masked temporaries
    return weights + vectors + x_tiles + inter + out_resident + stats_tmp


def _two_pass_vmem_need(tb, d_in_p, h_p, out_p):
    weights = 2 * (d_in_p * h_p + h_p * out_p) * 2
    vectors = 2 * (h_p + 3 * out_p) * 4
    x_tiles = 2 * tb * d_in_p * 2
    z_tiles = 2 * tb * out_p * 4
    part_tiles = 2 * 2 * 8 * out_p * 4
    inter = tb * (h_p + out_p) * 4
    return weights + vectors + x_tiles + z_tiles + part_tiles + inter


# ---------------------------------------------------------------------------
# Fused path: Linear -> ReLU -> Linear -> BatchNorm in one launch.
# z stays resident in the constant-index output block; the last grid step
# computes mean / centered variance and normalizes in place.
# ---------------------------------------------------------------------------
def fused_mlp_bn_kernel(x_ref, w1_ref, b1_ref, w2_ref, b2_ref, gamma_ref, beta_ref,
                        o_ref, *, tb, n_valid, has_pad):
    i = pl.program_id(0)

    h = jnp.dot(x_ref[...], w1_ref[...], preferred_element_type=jnp.float32)
    h = jnp.maximum(h + b1_ref[...], 0.0)
    z = jnp.dot(h.astype(jnp.bfloat16), w2_ref[...],
                preferred_element_type=jnp.float32) + b2_ref[...]

    start = pl.multiple_of(i * tb, 8)
    o_ref[pl.ds(start, tb), :] = z

    @pl.when(i == pl.num_programs(0) - 1)
    def _():
        zfull = o_ref[...]                                # (b_pad, out_p), f32
        inv_n = jnp.float32(1.0 / n_valid)
        if has_pad:
            rows = jax.lax.broadcasted_iota(jnp.int32, zfull.shape, 0)
            valid = rows < n_valid
            mean = jnp.sum(jnp.where(valid, zfull, 0.0), axis=0, keepdims=True) * inv_n
            cent = jnp.where(valid, zfull - mean, 0.0)
        else:
            mean = jnp.sum(zfull, axis=0, keepdims=True) * inv_n
            cent = zfull - mean
        var = jnp.sum(cent * cent, axis=0, keepdims=True) * inv_n
        scale = gamma_ref[...] * jax.lax.rsqrt(var + EPS)
        shift = beta_ref[...] - mean * scale
        o_ref[...] = zfull * scale + shift


# ---------------------------------------------------------------------------
# Two-pass fallback, pass 1: fused MLP + per-tile partial BN statistics.
# Fully parallel over batch tiles (no serialized accumulator).
# Statistics are accumulated on z - b2 (pre-bias) to reduce cancellation.
# ---------------------------------------------------------------------------
def mlp_partial_kernel(x_ref, w1_ref, b1_ref, w2_ref, b2_ref,
                       z_ref, psum_ref, psq_ref, *, tb, n_valid, has_pad):
    i = pl.program_id(0)

    h = jnp.dot(x_ref[...], w1_ref[...], preferred_element_type=jnp.float32)
    h = jnp.maximum(h + b1_ref[...], 0.0)
    z_nb = jnp.dot(h.astype(jnp.bfloat16), w2_ref[...],
                   preferred_element_type=jnp.float32)
    z_ref[...] = z_nb + b2_ref[...]

    def write_stats(zv):
        ps = jnp.sum(zv, axis=0, keepdims=True)
        psq = jnp.sum(zv * zv, axis=0, keepdims=True)
        psum_ref[...] = jnp.broadcast_to(ps, psum_ref.shape)
        psq_ref[...] = jnp.broadcast_to(psq, psq_ref.shape)

    if has_pad:
        last = pl.num_programs(0) - 1

        @pl.when(i < last)
        def _():
            write_stats(z_nb)

        @pl.when(i == last)
        def _():
            row = jax.lax.broadcasted_iota(jnp.int32, z_nb.shape, 0) + i * tb
            write_stats(jnp.where(row < n_valid, z_nb, 0.0))
    else:
        write_stats(z_nb)


# ---------------------------------------------------------------------------
# Two-pass fallback, pass 2: pure streaming fused multiply-add.
# ---------------------------------------------------------------------------
def bn_apply_kernel(z_ref, scale_ref, shift_ref, o_ref):
    o_ref[...] = z_ref[...] * scale_ref[...] + shift_ref[...]


@functools.partial(jax.jit, static_argnames=("force_two_pass",))
def simple_fully_connected(x, w1, b1, w2, b2, gamma, beta, *, force_two_pass=False):
    """x: (B, input_size) f32. w1: (input, hidden), w2: (hidden, output).
    b1/b2/gamma/beta: (feature,) or (1, feature). Returns (B, output_size) f32."""
    B, d_in = x.shape
    hdim = w1.shape[1]
    d_out = w2.shape[1]

    cap = _vmem_cap_bytes()
    d_in_p = _round_up(d_in, LANE)
    h_p = _round_up(hdim, LANE)
    out_p = _round_up(d_out, LANE)

    # Batch tile: balance tiles to minimize padding (padding < 8 rows typically).
    target_tb = 512 if cap >= 80 * 2**20 else 256
    n_goal = max(1, _cdiv(B, target_tb))
    tb = _round_up(_cdiv(B, n_goal), 8)
    b_pad = _round_up(B, tb)
    num_tiles = b_pad // tb
    has_pad = b_pad != B

    # Pad to lane-dense shapes; bf16 for MXU operands, f32 for elementwise operands.
    x_p = _pad2(x, b_pad, d_in_p).astype(jnp.bfloat16)
    w1_p = _pad2(w1, d_in_p, h_p).astype(jnp.bfloat16)
    w2_p = _pad2(w2, h_p, out_p).astype(jnp.bfloat16)
    b1_p = _pad2(b1.reshape(1, -1), 1, h_p).astype(jnp.float32)
    b2_p = _pad2(b2.reshape(1, -1), 1, out_p).astype(jnp.float32)
    g_p = _pad2(gamma.reshape(1, -1), 1, out_p).astype(jnp.float32)
    be_p = _pad2(beta.reshape(1, -1), 1, out_p).astype(jnp.float32)

    const2d = lambda i: (0, 0)
    batch_map = lambda i: (i, 0)

    fused_need = _fused_vmem_need(tb, d_in_p, h_p, out_p, b_pad)
    use_fused = (not force_two_pass) and fused_need <= int(0.8 * cap) and b_pad <= 4096

    if use_fused:
        # ------------------------- single fused launch -------------------------
        vmem_limit = min(cap, max(16 * 2**20, int(1.5 * fused_need)))
        out_pad = pl.pallas_call(
            functools.partial(fused_mlp_bn_kernel, tb=tb, n_valid=B, has_pad=has_pad),
            grid=(num_tiles,),
            in_specs=[
                pl.BlockSpec((tb, d_in_p), batch_map),
                pl.BlockSpec((d_in_p, h_p), const2d),
                pl.BlockSpec((1, h_p), const2d),
                pl.BlockSpec((h_p, out_p), const2d),
                pl.BlockSpec((1, out_p), const2d),
                pl.BlockSpec((1, out_p), const2d),
                pl.BlockSpec((1, out_p), const2d),
            ],
            out_specs=pl.BlockSpec((b_pad, out_p), const2d),
            out_shape=jax.ShapeDtypeStruct((b_pad, out_p), jnp.float32),
            compiler_params=pltpu.CompilerParams(
                dimension_semantics=("arbitrary",),
                vmem_limit_bytes=vmem_limit),
        )(x_p, w1_p, b1_p, w2_p, b2_p, g_p, be_p)
        return out_pad[:B, :d_out]

    # --------------------------- two-pass fallback -----------------------------
    # Pass 1: parallel batch-tiled MLP + per-tile partial sum / sumsq.
    need1 = _two_pass_vmem_need(tb, d_in_p, h_p, out_p)
    vmem1 = min(cap, max(16 * 2**20, int(1.5 * need1)))
    z_pad, psum, psq = pl.pallas_call(
        functools.partial(mlp_partial_kernel, tb=tb, n_valid=B, has_pad=has_pad),
        grid=(num_tiles,),
        in_specs=[
            pl.BlockSpec((tb, d_in_p), batch_map),
            pl.BlockSpec((d_in_p, h_p), const2d),
            pl.BlockSpec((1, h_p), const2d),
            pl.BlockSpec((h_p, out_p), const2d),
            pl.BlockSpec((1, out_p), const2d),
        ],
        out_specs=[
            pl.BlockSpec((tb, out_p), batch_map),
            pl.BlockSpec((8, out_p), batch_map),
            pl.BlockSpec((8, out_p), batch_map),
        ],
        out_shape=[
            jax.ShapeDtypeStruct((b_pad, out_p), jnp.float32),
            jax.ShapeDtypeStruct((num_tiles * 8, out_p), jnp.float32),
            jax.ShapeDtypeStruct((num_tiles * 8, out_p), jnp.float32),
        ],
        compiler_params=pltpu.CompilerParams(
            dimension_semantics=("parallel",),
            vmem_limit_bytes=vmem1),
    )(x_p, w1_p, b1_p, w2_p, b2_p)

    # Tiny (num_tiles, out_p) reduction + scale/shift precompute in plain JAX.
    s = jnp.sum(psum[::8], axis=0, keepdims=True)
    sq = jnp.sum(psq[::8], axis=0, keepdims=True)
    inv_n = jnp.float32(1.0 / B)
    mean_nb = s * inv_n
    var = jnp.maximum(sq * inv_n - mean_nb * mean_nb, 0.0)
    mean = mean_nb + b2_p
    scale = g_p * jax.lax.rsqrt(var + EPS)
    shift = be_p - mean * scale

    # Pass 2: pure streaming FMA, large decoupled batch tile, z aliased to output.
    tb2_target = 1024 if cap >= 80 * 2**20 else 512
    tb2 = tb
    for m in range(1, num_tiles + 1):
        if num_tiles % m:
            continue
        cand = tb * m
        if cand > tb2_target:
            break
        if 4 * cand * out_p * 4 + 4 * out_p * 4 <= int(0.8 * cap):
            tb2 = cand
    need2 = 4 * tb2 * out_p * 4 + 4 * out_p * 4
    vmem2 = min(cap, max(16 * 2**20, 2 * need2))

    out_pad = pl.pallas_call(
        bn_apply_kernel,
        grid=(b_pad // tb2,),
        in_specs=[
            pl.BlockSpec((tb2, out_p), batch_map),
            pl.BlockSpec((1, out_p), const2d),
            pl.BlockSpec((1, out_p), const2d),
        ],
        out_specs=pl.BlockSpec((tb2, out_p), batch_map),
        out_shape=jax.ShapeDtypeStruct((b_pad, out_p), jnp.float32),
        input_output_aliases={0: 0},
        compiler_params=pltpu.CompilerParams(
            dimension_semantics=("parallel",),
            vmem_limit_bytes=vmem2),
    )(z_pad, scale, shift)

    return out_pad[:B, :d_out]


def init_params(key, input_size, hidden_size, output_size):
    """PyTorch-style Linear init (uniform +/- 1/sqrt(fan_in)); BN affine gamma=1, beta=0."""
    k1, k2, k3, k4 = jax.random.split(key, 4)
    bound1 = 1.0 / jnp.sqrt(input_size)
    w1 = jax.random.uniform(k1, (input_size, hidden_size), jnp.float32, -bound1, bound1)
    b1 = jax.random.uniform(k2, (1, hidden_size), jnp.float32, -bound1, bound1)
    bound2 = 1.0 / jnp.sqrt(hidden_size)
    w2 = jax.random.uniform(k3, (hidden_size, output_size), jnp.float32, -bound2, bound2)
    b2 = jax.random.uniform(k4, (1, output_size), jnp.float32, -bound2, bound2)
    gamma = jnp.ones((1, output_size), jnp.float32)
    beta = jnp.zeros((1, output_size), jnp.float32)
    return w1, b1, w2, b2, gamma, beta


def reference(x, w1, b1, w2, b2, gamma, beta):
    """Same math as the module, using the same bf16-input / f32-accumulate dots."""
    h = jnp.dot(x.astype(jnp.bfloat16), w1.astype(jnp.bfloat16),
                preferred_element_type=jnp.float32) + b1
    h = jnp.maximum(h, 0.0)
    z = jnp.dot(h.astype(jnp.bfloat16), w2.astype(jnp.bfloat16),
                preferred_element_type=jnp.float32) + b2
    mean = jnp.mean(z, axis=0, keepdims=True)
    var = jnp.mean((z - mean) ** 2, axis=0, keepdims=True)
    return (z - mean) * jax.lax.rsqrt(var + EPS) * gamma + beta


if __name__ == "__main__":
    input_size, hidden_size, output_size = 32, 64, 16
    key = jax.random.PRNGKey(0)
    kx, kp, kx2 = jax.random.split(key, 3)
    w1, b1, w2, b2, gamma, beta = init_params(kp, input_size, hidden_size, output_size)

    # 1) Small batch -> fused single-launch path (demo shape).
    batch = 8
    x = jax.random.normal(kx, (batch, input_size), jnp.float32)
    out = jax.block_until_ready(simple_fully_connected(x, w1, b1, w2, b2, gamma, beta))
    ref = reference(x, w1, b1, w2, b2, gamma, beta)
    assert out.shape == (batch, output_size)
    assert jnp.allclose(out, ref, atol=1e-3, rtol=1e-3), float(jnp.max(jnp.abs(out - ref)))

    # 2) Larger batch -> multi-tile fused path (dynamic-slice writes + padded-row mask).
    batch2 = 600
    x2 = jax.random.normal(kx2, (batch2, input_size), jnp.float32)
    out2 = jax.block_until_ready(simple_fully_connected(x2, w1, b1, w2, b2, gamma, beta))
    ref2 = reference(x2, w1, b1, w2, b2, gamma, beta)
    assert out2.shape == (batch2, output_size)
    assert jnp.allclose(out2, ref2, atol=2e-3, rtol=2e-3), float(jnp.max(jnp.abs(out2 - ref2)))

    # 3) Same shapes through the two-pass (parallel partial-stats) fallback path.
    out3 = jax.block_until_ready(
        simple_fully_connected(x2, w1, b1, w2, b2, gamma, beta, force_two_pass=True))
    assert jnp.allclose(out3, ref2, atol=2e-3, rtol=2e-3), float(jnp.max(jnp.abs(out3 - ref2)))

    print("KERNEL_OK")
</pallas_src>

<mosaic_0001>
module attributes {stable_mosaic.version = 11 : i64} {
  func.func @fused_mlp_bn_kernel(%arg0: i32, %arg1: memref<8x128xbf16, #tpu.memory_space<vmem>>, %arg2: memref<128x128xbf16, #tpu.memory_space<vmem>>, %arg3: memref<1x128xf32, #tpu.memory_space<vmem>>, %arg4: memref<128x128xbf16, #tpu.memory_space<vmem>>, %arg5: memref<1x128xf32, #tpu.memory_space<vmem>>, %arg6: memref<1x128xf32, #tpu.memory_space<vmem>>, %arg7: memref<1x128xf32, #tpu.memory_space<vmem>>, %arg8: memref<8x128xf32, #tpu.memory_space<vmem>>) attributes {dimension_semantics = [#tpu.dimension_semantics<arbitrary>], iteration_bounds = array<i64: 1>, scalar_prefetch = 0 : i64, scratch_operands = 0 : i64, tpu.core_type = #tpu.core_type<tc>, window_params = [{transform_indices = @transform_0, window_bounds = array<i64: 8, 128>}, {pipeline_mode = #tpu.pipeline_mode<synchronous>, transform_indices = @transform_1, window_bounds = array<i64: 128, 128>}, {pipeline_mode = #tpu.pipeline_mode<synchronous>, transform_indices = @transform_2, window_bounds = array<i64: 1, 128>}, {pipeline_mode = #tpu.pipeline_mode<synchronous>, transform_indices = @transform_3, window_bounds = array<i64: 128, 128>}, {pipeline_mode = #tpu.pipeline_mode<synchronous>, transform_indices = @transform_4, window_bounds = array<i64: 1, 128>}, {pipeline_mode = #tpu.pipeline_mode<synchronous>, transform_indices = @transform_5, window_bounds = array<i64: 1, 128>}, {pipeline_mode = #tpu.pipeline_mode<synchronous>, transform_indices = @transform_6, window_bounds = array<i64: 1, 128>}, {pipeline_mode = #tpu.pipeline_mode<synchronous>, transform_indices = @transform_7, window_bounds = array<i64: 8, 128>}]} {
    %c0 = arith.constant 0 : index
    %c0_0 = arith.constant 0 : index
    %0 = vector.load %arg1[%c0, %c0_0] : memref<8x128xbf16, #tpu.memory_space<vmem>>, vector<8x128xbf16>
    %c0_1 = arith.constant 0 : index
    %c0_2 = arith.constant 0 : index
    %1 = vector.load %arg2[%c0_1, %c0_2] : memref<128x128xbf16, #tpu.memory_space<vmem>>, vector<128x128xbf16>
    %cst = arith.constant dense<0.000000e+00> : vector<8x128xf32>
    %2 = tpu.matmul %0, %1, %cst {dimension_numbers = #tpu.dot_dimension_numbers<[1], [0], [0], [1], [0, 0, 1, 1], [], []>} : vector<8x128xbf16>, vector<128x128xbf16>, vector<8x128xf32> -> vector<8x128xf32>
    %c0_3 = arith.constant 0 : index
    %c0_4 = arith.constant 0 : index
    %3 = vector.load %arg3[%c0_3, %c0_4] : memref<1x128xf32, #tpu.memory_space<vmem>>, vector<1x128xf32>
    %4 = vector.broadcast %3 : vector<1x128xf32> to vector<8x128xf32>
    %5 = arith.addf %2, %4 : vector<8x128xf32>
    %cst_5 = arith.constant 0.000000e+00 : f32
    %6 = vector.broadcast %cst_5 : f32 to vector<8x128xf32>
    %7 = arith.maximumf %5, %6 : vector<8x128xf32>
    %8 = arith.truncf %7 : vector<8x128xf32> to vector<8x128xbf16>
    %c0_6 = arith.constant 0 : index
    %c0_7 = arith.constant 0 : index
    %9 = vector.load %arg4[%c0_6, %c0_7] : memref<128x128xbf16, #tpu.memory_space<vmem>>, vector<128x128xbf16>
    %cst_8 = arith.constant dense<0.000000e+00> : vector<8x128xf32>
    %10 = tpu.matmul %8, %9, %cst_8 {dimension_numbers = #tpu.dot_dimension_numbers<[1], [0], [0], [1], [0, 0, 1, 1], [], []>} : vector<8x128xbf16>, vector<128x128xbf16>, vector<8x128xf32> -> vector<8x128xf32>
    %c0_9 = arith.constant 0 : index
    %c0_10 = arith.constant 0 : index
    %11 = vector.load %arg5[%c0_9, %c0_10] : memref<1x128xf32, #tpu.memory_space<vmem>>, vector<1x128xf32>
    %12 = vector.broadcast %11 : vector<1x128xf32> to vector<8x128xf32>
    %13 = arith.addf %10, %12 : vector<8x128xf32>
    %c8_i32 = arith.constant 8 : i32
    %14 = arith.muli %arg0, %c8_i32 : i32
    %15 = tpu.assume_multiple %14, 8 : i32
    %16 = arith.index_cast %15 : i32 to index
    %c0_11 = arith.constant 0 : index
    %17 = vector.load %arg8[%16, %c0_11] : memref<8x128xf32, #tpu.memory_space<vmem>>, vector<8x128xf32>
    tpu.vector_store %arg8[%16, %c0_11], %13 {strides = array<i32>} : memref<8x128xf32, #tpu.memory_space<vmem>>, vector<8x128xf32>,
    %c0_i32 = arith.constant 0 : i32
    %18 = arith.cmpi eq, %arg0, %c0_i32 : i32
    %19 = arith.extui %18 : i1 to i32
    %c0_i32_12 = arith.constant 0 : i32
    %20 = arith.cmpi ne, %19, %c0_i32_12 : i32
    scf.if %20 {
      %c0_13 = arith.constant 0 : index
      %c0_14 = arith.constant 0 : index
      %21 = vector.load %arg8[%c0_13, %c0_14] : memref<8x128xf32, #tpu.memory_space<vmem>>, vector<8x128xf32>
      %cst_15 = arith.constant dense<0.000000e+00> : vector<128xf32>
      %22 = vector.multi_reduction <add>, %21, %cst_15 [0] : vector<8x128xf32> to vector<128xf32>
      %23 = vector.shape_cast %22 : vector<128xf32> to vector<1x128xf32>
      %cst_16 = arith.constant 1.250000e-01 : f32
      %24 = vector.broadcast %cst_16 : f32 to vector<1x128xf32>
      %25 = arith.mulf %23, %24 : vector<1x128xf32>
      %26 = vector.broadcast %25 : vector<1x128xf32> to vector<8x128xf32>
      %27 = arith.subf %21, %26 : vector<8x128xf32>
      %28 = arith.mulf %27, %27 : vector<8x128xf32>
      %cst_17 = arith.constant dense<0.000000e+00> : vector<128xf32>
      %29 = vector.multi_reduction <add>, %28, %cst_17 [0] : vector<8x128xf32> to vector<128xf32>
      %30 = vector.shape_cast %29 : vector<128xf32> to vector<1x128xf32>
      %cst_18 = arith.constant 1.250000e-01 : f32
      %31 = vector.broadcast %cst_18 : f32 to vector<1x128xf32>
      %32 = arith.mulf %30, %31 : vector<1x128xf32>
      %c0_19 = arith.constant 0 : index
      %c0_20 = arith.constant 0 : index
      %33 = vector.load %arg6[%c0_19, %c0_20] : memref<1x128xf32, #tpu.memory_space<vmem>>, vector<1x128xf32>
      %cst_21 = arith.constant 9.99999974E-6 : f32
      %34 = vector.broadcast %cst_21 : f32 to vector<1x128xf32>
      %35 = arith.addf %32, %34 : vector<1x128xf32>
      %36 = math.rsqrt %35 : vector<1x128xf32>
      %37 = arith.mulf %33, %36 : vector<1x128xf32>
      %c0_22 = arith.constant 0 : index
      %c0_23 = arith.constant 0 : index
      %38 = vector.load %arg7[%c0_22, %c0_23] : memref<1x128xf32, #tpu.memory_space<vmem>>, vector<1x128xf32>
      %39 = arith.mulf %25, %37 : vector<1x128xf32>
      %40 = arith.subf %38, %39 : vector<1x128xf32>
      %41 = vector.broadcast %37 : vector<1x128xf32> to vector<8x128xf32>
      %42 = arith.mulf %21, %41 : vector<8x128xf32>
      %43 = vector.broadcast %40 : vector<1x128xf32> to vector<8x128xf32>
      %44 = arith.addf %42, %43 : vector<8x128xf32>
      %c0_24 = arith.constant 0 : index
      %c0_25 = arith.constant 0 : index
      %45 = vector.load %arg8[%c0_24, %c0_25] : memref<8x128xf32, #tpu.memory_space<vmem>>, vector<8x128xf32>
      tpu.vector_store %arg8[%c0_24, %c0_25], %44 {strides = array<i32>} : memref<8x128xf32, #tpu.memory_space<vmem>>, vector<8x128xf32>,
    } else {
    }
    return
  }
  func.func @transform_0(%arg0: i32) -> (i32, i32) {
    %c0_i32 = arith.constant 0 : i32
    %c0_i32_0 = arith.constant 0 : i32
    return %arg0, %c0_i32 : i32, i32
  }
  func.func @transform_1(%arg0: i32) -> (i32, i32) {
    %c0_i32 = arith.constant 0 : i32
    %c0_i32_0 = arith.constant 0 : i32
    %c0_i32_1 = arith.constant 0 : i32
    return %c0_i32, %c0_i32_0 : i32, i32
  }
  func.func @transform_2(%arg0: i32) -> (i32, i32) {
    %c0_i32 = arith.constant 0 : i32
    %c0_i32_0 = arith.constant 0 : i32
    %c0_i32_1 = arith.constant 0 : i32
    return %c0_i32, %c0_i32_0 : i32, i32
  }
  func.func @transform_3(%arg0: i32) -> (i32, i32) {
    %c0_i32 = arith.constant 0 : i32
    %c0_i32_0 = arith.constant 0 : i32
    %c0_i32_1 = arith.constant 0 : i32
    return %c0_i32, %c0_i32_0 : i32, i32
  }
  func.func @transform_4(%arg0: i32) -> (i32, i32) {
    %c0_i32 = arith.constant 0 : i32
    %c0_i32_0 = arith.constant 0 : i32
    %c0_i32_1 = arith.constant 0 : i32
    return %c0_i32, %c0_i32_0 : i32, i32
  }
  func.func @transform_5(%arg0: i32) -> (i32, i32) {
    %c0_i32 = arith.constant 0 : i32
    %c0_i32_0 = arith.constant 0 : i32
    %c0_i32_1 = arith.constant 0 : i32
    return %c0_i32, %c0_i32_0 : i32, i32
  }
  func.func @transform_6(%arg0: i32) -> (i32, i32) {
    %c0_i32 = arith.constant 0 : i32
    %c0_i32_0 = arith.constant 0 : i32
    %c0_i32_1 = arith.constant 0 : i32
    return %c0_i32, %c0_i32_0 : i32, i32
  }
  func.func @transform_7(%arg0: i32) -> (i32, i32) {
    %c0_i32 = arith.constant 0 : i32
    %c0_i32_0 = arith.constant 0 : i32
    %c0_i32_1 = arith.constant 0 : i32
    return %c0_i32, %c0_i32_0 : i32, i32
  }
}

</mosaic_0001>

<llo_original>
// kernel: simple_fully_connected.1
$region0: #{simple_fully_connected.1}
  #allocation0 [shape = 'u32[]', space=smem, size = 0x4, offset = 0x4, fixed_abs, tag = 'smem constant byte address 0x4 - core index']
  #allocation1 [shape = 'u32[72,128]{1,0:T(1,128)}', space=vmem, size = 0x9000, scoped, tag = 'internal scratch']
  %s0 = inlined_call_operand.vmem [shape: bf16[8,128], index: 0, kind: input, shape index: {}]
  %s1 = inlined_call_operand.vmem [shape: bf16[128,128], index: 1, kind: input, shape index: {}]
  %s2 = inlined_call_operand.vmem [shape: f32[1,128], index: 2, kind: input, shape index: {}]
  %s3 = inlined_call_operand.vmem [shape: bf16[128,128], index: 3, kind: input, shape index: {}]
  %s4 = inlined_call_operand.vmem [shape: f32[1,128], index: 4, kind: input, shape index: {}]
  %s5 = inlined_call_operand.vmem [shape: f32[1,128], index: 5, kind: input, shape index: {}]
  %s6 = inlined_call_operand.vmem [shape: f32[1,128], index: 6, kind: input, shape index: {}]
  %s7 = inlined_call_operand.hbm [shape: f32[8,128], index: 7, kind: output, shape index: {}]
  %s8 = sld [smem:[#allocation0]]
  $region42: #{simple_fully_connected.1} parent=0
    _
  %s10 = ssub.s32 1, %s8
  %s11 = scalar_select 0, %s10, %s8
  $region1: #{simple_fully_connected.1} parent=0
    #allocation2 [shape = 'u8[4096]{0}', space=vmem, size = 0x1000, scoped, tag = 'output window, operand 0, single buffered']
    #allocation3 [shape = 's32[1]{0}', space=sflag, size = 0x4, scoped, tag = 'scoped memory for simple_fully_connected.1']
    %12 = vsyncpa [#allocation3], 0
    // Predicated region
    $region2: #{simple_fully_connected.1} parent=1 // pred_check
      _
    $region3: #{simple_fully_connected.1} parent=1 // pred_check_branch
      %14 = sbr.rel (0) target = $region5
    $region4: #{simple_fully_connected.1} parent=1 // pred_region
      _
    $region5: #{simple_fully_connected.1} parent=1 // pred_fallthru
      _
    // Predicated region
    $region6: #{simple_fully_connected.1} parent=1 // pred_check
      _
    $region7: #{simple_fully_connected.1} parent=1 // pred_check_branch
      %16 = sbr.rel (0) target = $region9
    $region8: #{simple_fully_connected.1} parent=1 // pred_region
      _
    $region9: #{simple_fully_connected.1} parent=1 // pred_fallthru
      _
    // Predicated region
    $region10: #{simple_fully_connected.1} parent=1 // pred_check
      _
    $region11: #{simple_fully_connected.1} parent=1 // pred_check_branch
      %18 = sbr.rel (0) target = $region13
    $region12: #{simple_fully_connected.1} parent=1 // pred_region
      _
    $region13: #{simple_fully_connected.1} parent=1 // pred_fallthru
      _
    // Predicated region
    $region14: #{simple_fully_connected.1} parent=1 // pred_check
      _
    $region15: #{simple_fully_connected.1} parent=1 // pred_check_branch
      %20 = sbr.rel (0) target = $region17
    $region16: #{simple_fully_connected.1} parent=1 // pred_region
      _
    $region17: #{simple_fully_connected.1} parent=1 // pred_fallthru
      _
    // Predicated region
    $region18: #{simple_fully_connected.1} parent=1 // pred_check
      _
    $region19: #{simple_fully_connected.1} parent=1 // pred_check_branch
      %22 = sbr.rel (0) target = $region21
    $region20: #{simple_fully_connected.1} parent=1 // pred_region
      _
    $region21: #{simple_fully_connected.1} parent=1 // pred_fallthru
      _
    // Predicated region
    $region22: #{simple_fully_connected.1} parent=1 // pred_check
      _
    $region23: #{simple_fully_connected.1} parent=1 // pred_check_branch
      %24 = sbr.rel (0) target = $region25
    $region24: #{simple_fully_connected.1} parent=1 // pred_region
      _
    $region25: #{simple_fully_connected.1} parent=1 // pred_fallthru
      _
    // Predicated region
    $region26: #{simple_fully_connected.1} parent=1 // pred_check
      _
    $region27: #{simple_fully_connected.1} parent=1 // pred_check_branch
      %26 = sbr.rel (0) target = $region29
    $region28: #{simple_fully_connected.1} parent=1 // pred_region
      _
    $region29: #{simple_fully_connected.1} parent=1 // pred_fallthru
      _
    %v27 = vld [vmem:[%s0] sm:$0xf]
    %v28 = vld [vmem:[%s1] sm:$0xf]
    %v29 = vld [vmem:[%s1 + $0x4] sm:$0xf]
    %v30 = vld [vmem:[%s1 + $0x8] sm:$0xf]
    %v31 = vld [vmem:[%s1 + $0xc] sm:$0xf]
    %v32 = vld [vmem:[%s1 + $0x10] sm:$0xf]
    %v33 = vld [vmem:[%s1 + $0x14] sm:$0xf]
    %v34 = vld [vmem:[%s1 + $0x18] sm:$0xf]
    %v35 = vld [vmem:[%s1 + $0x1c] sm:$0xf]
    %v36 = vld [vmem:[%s1 + $0x20] sm:$0xf]
    %v37 = vld [vmem:[%s1 + $0x24] sm:$0xf]
    %v38 = vld [vmem:[%s1 + $0x28] sm:$0xf]
    %v39 = vld [vmem:[%s1 + $0x2c] sm:$0xf]
    %v40 = vld [vmem:[%s1 + $0x30] sm:$0xf]
    %v41 = vld [vmem:[%s1 + $0x34] sm:$0xf]
    %v42 = vld [vmem:[%s1 + $0x38] sm:$0xf]
    %v43 = vld [vmem:[%s1 + $0x3c] sm:$0xf]
    %v44 = vld [vmem:[%s2] sm:$0x1]
    %v46 = vperm.slane %v44, 0
    %v64 = vunpack.c.l.b16 %v28
    %v65 = vunpack.c.l.b16 %v29
    %v66 = vunpack.c.l.b16 %v30
    %v67 = vunpack.c.l.b16 %v31
    %v68 = vunpack.c.l.b16 %v32
    %v69 = vunpack.c.l.b16 %v33
    %v70 = vunpack.c.l.b16 %v34
    %v71 = vunpack.c.l.b16 %v35
    %v72 = vunpack.c.l.b16 %v36
    %v73 = vunpack.c.l.b16 %v37
    %v74 = vunpack.c.l.b16 %v38
    %v75 = vunpack.c.l.b16 %v39
    %v76 = vunpack.c.l.b16 %v40
    %v77 = vunpack.c.l.b16 %v41
    %v78 = vunpack.c.l.b16 %v42
    %v79 = vunpack.c.l.b16 %v43
    %v80 = vpack.c.b16 %v65, %v64
    %v81 = vpack.c.b16 %v67, %v66
    %v82 = vpack.c.b16 %v69, %v68
    %v83 = vpack.c.b16 %v71, %v70
    %v84 = vpack.c.b16 %v73, %v72
    %v85 = vpack.c.b16 %v75, %v74
    %v86 = vpack.c.b16 %v77, %v76
    %v87 = vpack.c.b16 %v79, %v78
    %96 = vmatpush.bf16.msra.mxu0 %v87
    %97 = vmatpush.bf16.msra.mxu0 %v86
    %98 = vmatpush.bf16.msra.mxu0 %v85
    %99 = vmatpush.bf16.msra.mxu0 %v84
    %100 = vmatpush.bf16.msra.mxu0 %v83
    %101 = vmatpush.bf16.msra.mxu0 %v82
    %102 = vmatpush.bf16.msra.mxu0 %v81
    %103 = vmatpush.bf16.msra.mxu0 %v80
    %104 = vmatmul.bf16.gmra.mxu0 %v27
    %v105 = vpop.f32.mrf.mxu0
    %v106 = vadd.f32 %v46, %v105
    %v107 = vpop.f32.mrf.mxu0
    %108 = vdwg.mxu0
    %v109 = vmax.f32 %v106, 0.0
    %v110 = vpack.c.bf16 %v109, %v109
    %v111 = vld [vmem:[%s3] sm:$0xf]
    %v112 = vld [vmem:[%s3 + $0x4] sm:$0xf]
    %v113 = vld [vmem:[%s3 + $0x8] sm:$0xf]
    %v114 = vld [vmem:[%s3 + $0xc] sm:$0xf]
    %v115 = vld [vmem:[%s3 + $0x10] sm:$0xf]
    %v116 = vld [vmem:[%s3 + $0x14] sm:$0xf]
    %v117 = vld [vmem:[%s3 + $0x18] sm:$0xf]
    %v118 = vld [vmem:[%s3 + $0x1c] sm:$0xf]
    %v119 = vld [vmem:[%s3 + $0x20] sm:$0xf]
    %v120 = vld [vmem:[%s3 + $0x24] sm:$0xf]
    %v121 = vld [vmem:[%s3 + $0x28] sm:$0xf]
    %v122 = vld [vmem:[%s3 + $0x2c] sm:$0xf]
    %v123 = vld [vmem:[%s3 + $0x30] sm:$0xf]
    %v124 = vld [vmem:[%s3 + $0x34] sm:$0xf]
    %v125 = vld [vmem:[%s3 + $0x38] sm:$0xf]
    %v126 = vld [vmem:[%s3 + $0x3c] sm:$0xf]
    %v127 = vld [vmem:[%s4] sm:$0x1]
    %v129 = vperm.slane %v127, 0
    %v147 = vunpack.c.l.b16 %v111
    %v148 = vunpack.c.l.b16 %v112
    %v149 = vunpack.c.l.b16 %v113
    %v150 = vunpack.c.l.b16 %v114
    %v151 = vunpack.c.l.b16 %v115
    %v152 = vunpack.c.l.b16 %v116
    %v153 = vunpack.c.l.b16 %v117
    %v154 = vunpack.c.l.b16 %v118
    %v155 = vunpack.c.l.b16 %v119
    %v156 = vunpack.c.l.b16 %v120
    %v157 = vunpack.c.l.b16 %v121
    %v158 = vunpack.c.l.b16 %v122
    %v159 = vunpack.c.l.b16 %v123
    %v160 = vunpack.c.l.b16 %v124
    %v161 = vunpack.c.l.b16 %v125
    %v162 = vunpack.c.l.b16 %v126
    %v163 = vpack.c.b16 %v148, %v147
    %v164 = vpack.c.b16 %v150, %v149
    %v165 = vpack.c.b16 %v152, %v151
    %v166 = vpack.c.b16 %v154, %v153
    %v167 = vpack.c.b16 %v156, %v155
    %v168 = vpack.c.b16 %v158, %v157
    %v169 = vpack.c.b16 %v160, %v159
    %v170 = vpack.c.b16 %v162, %v161
    %179 = vmatpush.bf16.msra.mxu0 %v170
    %180 = vmatpush.bf16.msra.mxu0 %v169
    %181 = vmatpush.bf16.msra.mxu0 %v168
    %182 = vmatpush.bf16.msra.mxu0 %v167
    %183 = vmatpush.bf16.msra.mxu0 %v166
    %184 = vmatpush.bf16.msra.mxu0 %v165
    %185 = vmatpush.bf16.msra.mxu0 %v164
    %186 = vmatpush.bf16.msra.mxu0 %v163
    %187 = vmatmul.bf16.gmra.mxu0 %v110
    %v188 = vpop.f32.mrf.mxu0
    %v189 = vadd.f32 %v129, %v188
    %v190 = vpop.f32.mrf.mxu0
    %191 = vdwg.mxu0
    %s192 = smul.u32 0, 8
    %s193 = scalar_lea.vmem [#allocation2], %s192
    %194 = vst [vmem:[%s193] sm:$0xff] %v189
    %p195 = scmp.eq.s32.totalorder 0, 0
    // Predicated region
    $region30: #{simple_fully_connected.1} parent=1 // pred_check
      %p196 = pneg %p195
    $region31: #{simple_fully_connected.1} parent=1 // pred_check_branch
      %198 = sbr.rel (%p196) target = $region33
    $region32: #{simple_fully_connected.1} parent=1 // pred_region
      %v199 = vld [vmem:[#allocation2] sm:$0xff]
      %v200 = vrot.slane %v199, 4
      %v201 = vadd.f32 %v199, %v200
      %v202 = vrot.slane %v201, 2
      %v203 = vadd.f32 %v201, %v202
      %v204 = vrot.slane %v203, 1
      %v205 = vadd.f32 %v203, %v204
      %v206 = vmul.f32 %v205, 0.125
      %v207 = vsub.f32 %v199, %v206
      %v208 = vmul.f32 %v207, %v207
      %v209 = vrot.slane %v208, 4
      %v210 = vadd.f32 %v208, %v209
      %v211 = vrot.slane %v210, 2
      %v212 = vadd.f32 %v210, %v211
      %v213 = vrot.slane %v212, 1
      %v214 = vadd.f32 %v212, %v213
      %v215 = vmul.f32 %v214, 0.125
      %v216 = vld [vmem:[%s5] sm:$0x1]
      %v217 = vadd.f32 %v215, 1e-05
      %v218 = vrsqrt.pop %v217
      %v219 = vmul.f32 %v218, %v217
      %v220 = vmul.f32 %v219, %v218
      %v221 = vmul.f32 0.5, %v220
      %v222 = vsub.f32 1.5, %v221
      %v223 = vmul.f32 %v218, %v222
      %vm224 = vweird.f32 %v217
      %vm225 = vweird.f32 %v218
      %vm226 = vmor %vm224, %vm225
      %v227 = vsel %vm226, %v218, %v223
      %v228 = vmul.f32 %v216, %v227
      %v229 = vld [vmem:[%s6] sm:$0x1]
      %v230 = vmul.f32 %v206, %v228
      %v231 = vsub.f32 %v229, %v230
      %v233 = vperm.slane %v228, 0
      %v235 = vmul.f32 %v199, %v233
      %v237 = vperm.slane %v231, 0
      %v239 = vadd.f32 %v235, %v237
      %240 = vst [vmem:[#allocation2] sm:$0xff] %v239
    $region33: #{simple_fully_connected.1} parent=1 // pred_fallthru
      _
    // Predicated region
    $region34: #{simple_fully_connected.1} parent=1 // pred_check
      _
    $region35: #{simple_fully_connected.1} parent=1 // pred_check_branch
      %242 = sbr.rel (0) target = $region37
    $region36: #{simple_fully_connected.1} parent=1 // pred_region
      %244 = vsyncadd [#allocation3], 0
      %s246 = sshll.u32 [#allocation2], 4
      %s247 = int_to_ptr.vmem [resolvable:$true] %s246
      %s248 = sshll.u32 %s7, 4
      %s249 = int_to_ptr.hbm [resolvable:$true] %s248
      %251 = dma.vmem_to_hbm [thread:$0]  %s247, 128, %s249, [#allocation3]
    $region37: #{simple_fully_connected.1} parent=1 // pred_fallthru
      _
    // Predicated region
    $region38: #{simple_fully_connected.1} parent=1 // pred_check
      _
    $region39: #{simple_fully_connected.1} parent=1 // pred_check_branch
      %253 = sbr.rel (0) target = $region41
    $region40: #{simple_fully_connected.1} parent=1 // pred_region
      %255 = dma.done [#allocation3], 128
    $region41: #{simple_fully_connected.1} parent=1 // pred_fallthru
      _
    %256 = vsyncpa [#allocation3], 1

</llo_original>
